<compile_context>
chip_gen: v7x
topology: tpu7x:2x2x1
jax: 0.10.0
libtpu: 0.0.40
codegen_flags: <defaults>
</compile_context>

<pallas_src>
import jax
import jax.numpy as jnp
from jax.experimental import pallas as pl
from jax.experimental.pallas import tpu as pltpu


_MXU_OPERAND_DTYPE = jnp.bfloat16          # hoisted matmul / FC operands
_VMEM_LIMIT_BYTES = 32 * 1024 * 1024       # explicit, safe on v5e/v6e/v7x


def _round_up(x, m):
    return ((x + m - 1) // m) * m


# -----------------------------------------------------------------------------
# Grouped tiled matmul + bias: y[g] = x @ w[g] + b[g]
# Used for (a) the hoisted input-gate matmul (one group per direction) and
# (b) the final Linear (G = 1).
# -----------------------------------------------------------------------------
def _matmul_bias_kernel(x_ref, w_ref, b_ref, o_ref):
    o_ref[...] = (
        jnp.dot(x_ref[...], w_ref[...], preferred_element_type=jnp.float32)
        + b_ref[...]
    ).astype(o_ref.dtype)


def grouped_matmul_bias(x, w, b, *, tm_target=256, tn_target=512):
    """x: (M, K); w: (G, K, N); b: (G, 1, N) -> (G, M, N) float32."""
    M, K = x.shape
    G, _, N = w.shape

    # bf16 MXU operands (f32 accumulate): full MXU rate on v6e/v7x.
    x = x.astype(_MXU_OPERAND_DTYPE)
    w = w.astype(_MXU_OPERAND_DTYPE)
    b = b.astype(jnp.float32)

    # M tiling with padding (no "single giant block" fallback for ragged M).
    tm = tm_target if M >= tm_target else _round_up(M, 8)
    Mp = _round_up(M, tm)
    if Mp != M:
        x = jnp.pad(x, ((0, Mp - M), (0, 0)))

    # N tiling (caps the weight/output block instead of loading full (K, N)).
    tn = N
    for cand in (tn_target, 256, 128):
        if N >= cand and N % cand == 0:
            tn = cand
            break

    # M is the fastest grid axis so the (K, tn) weight block stays resident
    # across the M sweep.
    grid = (G, N // tn, Mp // tm)
    out = pl.pallas_call(
        _matmul_bias_kernel,
        out_shape=jax.ShapeDtypeStruct((G, Mp, N), jnp.float32),
        grid=grid,
        in_specs=[
            pl.BlockSpec((tm, K), lambda g, j, i: (i, 0)),
            pl.BlockSpec((None, K, tn), lambda g, j, i: (g, 0, j)),
            pl.BlockSpec((None, 1, tn), lambda g, j, i: (g, 0, j)),
        ],
        out_specs=pl.BlockSpec((None, tm, tn), lambda g, j, i: (g, i, j)),
        compiler_params=pltpu.CompilerParams(
            dimension_semantics=("parallel", "parallel", "parallel"),
            vmem_limit_bytes=_VMEM_LIMIT_BYTES,
        ),
    )(x, w, b)
    # TODO(synk): add K-axis tiling with a VMEM f32 accumulator ("arbitrary" K
    # axis) for very large K on v7x's 64 MiB VMEM.
    return out[:, :M] if Mp != M else out


# -----------------------------------------------------------------------------
# GRU recurrence kernel.
#   grid = (num_dirs, num_time_chunks): directions "parallel" (2 TCs on v7x),
#   time chunks "arbitrary" with the hidden state carried in VMEM scratch.
#   gi (input gates, with b_ih + b_hh_{r,z} folded in) is precomputed outside.
#   Gate order follows PyTorch: r, z, n.
# -----------------------------------------------------------------------------
def _gru_recurrence_kernel(gi_ref, whh_ref, bhn_ref, out_ref, h_scr):
    # gi_ref : (Tc, B, 3H)   precomputed x@W_ih + b_ih + b_hh_{r,z} for this chunk
    # whh_ref: (H, 3H)       fused recurrent weights (r | z | n)
    # bhn_ref: (1, H)        recurrent bias of the n gate (stays under the r*)
    # out_ref: (Tc, B, H)
    # h_scr  : (B, H) VMEM   hidden state carried across time chunks
    Tc = gi_ref.shape[0]
    H = out_ref.shape[-1]
    reverse = pl.program_id(0) == 1          # direction 1 is the reverse direction

    @pl.when(pl.program_id(1) == 0)
    def _():
        h_scr[...] = jnp.zeros_like(h_scr)

    w_hh = whh_ref[...]                      # resident across the whole chunk loop
    b_hn = bhn_ref[...]

    def step(i, carry):
        t = jnp.where(reverse, Tc - 1 - i, i)
        gi = gi_ref[t]                                                 # (B, 3H)
        h = h_scr[...]                                                 # (B, H)
        gh = jnp.dot(h, w_hh, preferred_element_type=jnp.float32)     # (B, 3H)
        r = jax.nn.sigmoid(gi[:, 0:H] + gh[:, 0:H])
        z = jax.nn.sigmoid(gi[:, H:2 * H] + gh[:, H:2 * H])
        n = jnp.tanh(gi[:, 2 * H:] + r * (gh[:, 2 * H:] + b_hn))
        h_new = (1.0 - z) * n + z * h
        h_scr[...] = h_new
        out_ref[t] = h_new
        return carry

    # unroll=2: lets the scheduler overlap step i+1's gi slice load / EUP work
    # with step i's MXU drain.
    jax.lax.fori_loop(0, Tc, step, 0, unroll=2)


def _choose_time_chunk(T, B, H, budget_bytes=2 * 1024 * 1024):
    """Largest divisor of T whose per-chunk gi+out VMEM stays under the budget."""
    per_t_bytes = B * (3 * H + H) * 4
    tc = int(max(1, min(T, budget_bytes // max(per_t_bytes, 1))))
    while T % tc:
        tc -= 1
    return tc


def gru_recurrence(gi, w_hh, b_hn):
    """gi: (nd, T, B, 3H); w_hh: (nd, H, 3H); b_hn: (nd, 1, H) -> (nd, T, B, H).

    Reverse-direction outputs are stored at their original time indices.
    """
    num_dirs, T, B, G = gi.shape
    H = G // 3
    Tc = _choose_time_chunk(T, B, H)
    nc = T // Tc

    def _time_block(d, c):
        # forward (d == 0): chunks 0..nc-1 ; reverse (d == 1): nc-1..0
        return c + d * (nc - 1 - 2 * c)

    flops = num_dirs * T * (2 * B * H * 3 * H + 12 * B * H)
    return pl.pallas_call(
        _gru_recurrence_kernel,
        out_shape=jax.ShapeDtypeStruct((num_dirs, T, B, H), jnp.float32),
        grid=(num_dirs, nc),
        in_specs=[
            pl.BlockSpec((None, Tc, B, 3 * H),
                         lambda d, c: (d, _time_block(d, c), 0, 0)),
            pl.BlockSpec((None, H, 3 * H), lambda d, c: (d, 0, 0)),
            pl.BlockSpec((None, 1, H), lambda d, c: (d, 0, 0)),
        ],
        out_specs=pl.BlockSpec((None, Tc, B, H),
                               lambda d, c: (d, _time_block(d, c), 0, 0)),
        scratch_shapes=[pltpu.VMEM((B, H), jnp.float32)],
        compiler_params=pltpu.CompilerParams(
            dimension_semantics=("parallel", "arbitrary"),
            vmem_limit_bytes=_VMEM_LIMIT_BYTES,
        ),
        cost_estimate=pl.CostEstimate(
            flops=flops,
            transcendentals=3 * num_dirs * T * B * H,
            bytes_accessed=4 * (gi.size + num_dirs * T * B * H
                                + w_hh.size + b_hn.size),
        ),
    )(gi, w_hh, b_hn)


# -----------------------------------------------------------------------------
# Parameter init (PyTorch-style uniform(-1/sqrt(H), 1/sqrt(H))).
# Gate weights are stored pre-fused, pre-transposed and grouped per direction:
#   w_ih: (nd, E, 3H)   b_ih: (nd, 1, 3H)   w_hh: (nd, H, 3H)   b_hh: (nd, 1, 3H)
# -----------------------------------------------------------------------------
def init_params(key, vocab_size, hidden_size, num_layers, bidirectional):
    num_dirs = 2 if bidirectional else 1
    H = hidden_size
    bound = 1.0 / float(H) ** 0.5
    keys = iter(jax.random.split(key, 1 + num_layers * 4 + 2))

    params = {
        "embedding": jax.random.normal(next(keys), (vocab_size, H), jnp.float32),
        "gru": [],
    }
    for layer in range(num_layers):
        in_size = H if layer == 0 else H * num_dirs
        params["gru"].append(
            dict(
                w_ih=jax.random.uniform(next(keys), (num_dirs, in_size, 3 * H),
                                        jnp.float32, -bound, bound),
                b_ih=jax.random.uniform(next(keys), (num_dirs, 1, 3 * H),
                                        jnp.float32, -bound, bound),
                w_hh=jax.random.uniform(next(keys), (num_dirs, H, 3 * H),
                                        jnp.float32, -bound, bound),
                b_hh=jax.random.uniform(next(keys), (num_dirs, 1, 3 * H),
                                        jnp.float32, -bound, bound),
            )
        )
    if bidirectional:
        fc_bound = 1.0 / float(2 * H) ** 0.5
        params["fc_w_t"] = jax.random.uniform(next(keys), (2 * H, H), jnp.float32,
                                              -fc_bound, fc_bound)
        params["fc_b"] = jax.random.uniform(next(keys), (1, H), jnp.float32,
                                            -fc_bound, fc_bound)
    return params


# -----------------------------------------------------------------------------
# EncoderRNN forward.  tokens: int32 (B, T) -> (output, hidden)
#   output: (B, T, H)                     (fc-projected if bidirectional)
#   hidden: (num_layers*num_dirs, B, H)   (PyTorch layer-major, direction-minor)
# -----------------------------------------------------------------------------
def encoder_rnn_forward(params, tokens, *, bidirectional):
    B, T = tokens.shape
    H = params["embedding"].shape[-1]
    num_dirs = 2 if bidirectional else 1

    # Embedding lookup (gather) -- glue in plain JAX.
    embedded = jnp.take(params["embedding"], tokens, axis=0)           # (B, T, H)
    # nn.Dropout is identity in eval mode.
    # TODO(synk): training-mode dropout (pltpu.prng_random_bits mask) not emitted.

    x = jnp.transpose(embedded, (1, 0, 2)).astype(jnp.float32)         # (T, B, H)
    Bp = _round_up(B, 8)                       # sublane-align the batch dimension
    if Bp != B:
        x = jnp.pad(x, ((0, 0), (0, Bp - B), (0, 0)))

    hiddens = []
    for lp in params["gru"]:
        E = x.shape[-1]
        # Fold the r/z recurrent biases into the precomputed input-gate bias.
        b_gi = lp["b_ih"].at[:, :, :2 * H].add(lp["b_hh"][:, :, :2 * H])
        b_hn = lp["b_hh"][:, :, 2 * H:]                                 # (nd, 1, H)

        # Hoisted input-gate matmul, one group per direction: no HBM transpose.
        gi = grouped_matmul_bias(x.reshape(T * Bp, E), lp["w_ih"], b_gi)
        gi = gi.reshape(num_dirs, T, Bp, 3 * H)

        out = gru_recurrence(gi, lp["w_hh"], b_hn)                      # (nd,T,Bp,H)

        hiddens.append(out[0, T - 1])            # forward direction final hidden
        if num_dirs == 2:
            hiddens.append(out[1, 0])            # reverse direction final hidden

        x = out[0] if num_dirs == 1 else jnp.concatenate([out[0], out[1]], axis=-1)

    output = jnp.transpose(x, (1, 0, 2))                                # (Bp,T,nd*H)
    hidden = jnp.stack(hiddens, axis=0)                                 # (L*nd,Bp,H)

    if bidirectional:
        out2d = grouped_matmul_bias(output.reshape(Bp * T, num_dirs * H),
                                    params["fc_w_t"][None], params["fc_b"][None])[0]
        output = out2d.reshape(Bp, T, H)
    return output[:B], hidden[:, :B]


# -----------------------------------------------------------------------------
# Pure-JAX reference (lax.scan GRU, f32) for correctness check.
# -----------------------------------------------------------------------------
def _ref_gru_direction(x_tbe, w_ih, w_hh, b_ih, b_hh, reverse):
    H = w_hh.shape[0]
    xs = jnp.flip(x_tbe, 0) if reverse else x_tbe

    def step(h, xt):
        gi = xt @ w_ih + b_ih
        gh = h @ w_hh + b_hh
        r = jax.nn.sigmoid(gi[:, :H] + gh[:, :H])
        z = jax.nn.sigmoid(gi[:, H:2 * H] + gh[:, H:2 * H])
        n = jnp.tanh(gi[:, 2 * H:] + r * gh[:, 2 * H:])
        h_new = (1.0 - z) * n + z * h
        return h_new, h_new

    h0 = jnp.zeros((x_tbe.shape[1], H), jnp.float32)
    _, ys = jax.lax.scan(step, h0, xs)
    return jnp.flip(ys, 0) if reverse else ys


def encoder_rnn_reference(params, tokens, *, bidirectional):
    B, T = tokens.shape
    H = params["embedding"].shape[-1]
    num_dirs = 2 if bidirectional else 1
    x = jnp.transpose(jnp.take(params["embedding"], tokens, axis=0),
                      (1, 0, 2)).astype(jnp.float32)
    hiddens = []
    for lp in params["gru"]:
        outs = []
        for d in range(num_dirs):
            out = _ref_gru_direction(x, lp["w_ih"][d], lp["w_hh"][d],
                                     lp["b_ih"][d], lp["b_hh"][d], d == 1)
            outs.append(out)
            hiddens.append(out[0] if d == 1 else out[T - 1])
        x = jnp.concatenate(outs, axis=-1)
    output = jnp.transpose(x, (1, 0, 2))
    hidden = jnp.stack(hiddens, axis=0)
    if bidirectional:
        output = (output.reshape(B * T, -1) @ params["fc_w_t"]
                  + params["fc_b"]).reshape(B, T, H)
    return output, hidden


if __name__ == "__main__":
    vocab_size = 20
    hidden_size = 32
    num_layers = 2
    bidirectional = True
    B, T = 2, 8

    key = jax.random.PRNGKey(0)
    k_params, k_tok = jax.random.split(key)
    params = init_params(k_params, vocab_size, hidden_size, num_layers, bidirectional)
    tokens = jax.random.randint(k_tok, (B, T), 0, vocab_size, dtype=jnp.int32)

    output, hidden = encoder_rnn_forward(params, tokens, bidirectional=bidirectional)
    output, hidden = jax.block_until_ready((output, hidden))

    assert output.shape == (B, T, hidden_size), output.shape
    assert hidden.shape == (num_layers * 2, B, hidden_size), hidden.shape

    ref_out, ref_hid = encoder_rnn_reference(params, tokens, bidirectional=bidirectional)
    # bf16 MXU operands on the hoisted matmuls -> compare with a bf16-tolerant bound.
    assert jnp.allclose(output, ref_out, atol=2e-2, rtol=2e-2), \
        float(jnp.max(jnp.abs(output - ref_out)))
    assert jnp.allclose(hidden, ref_hid, atol=2e-2, rtol=2e-2), \
        float(jnp.max(jnp.abs(hidden - ref_hid)))

    print("KERNEL_OK")
</pallas_src>

<mosaic_0001>
module attributes {stable_mosaic.version = 11 : i64} {
  func.func @_matmul_bias_kernel(%arg0: i32, %arg1: i32, %arg2: i32, %arg3: memref<64x32xbf16, #tpu.memory_space<vmem>>, %arg4: memref<1x32x96xbf16, #tpu.memory_space<vmem>>, %arg5: memref<1x1x96xf32, #tpu.memory_space<vmem>>, %arg6: memref<1x64x96xf32, #tpu.memory_space<vmem>>) attributes {dimension_semantics = [#tpu.dimension_semantics<parallel>, #tpu.dimension_semantics<parallel>, #tpu.dimension_semantics<parallel>], iteration_bounds = array<i64: 2, 1, 1>, scalar_prefetch = 0 : i64, scratch_operands = 0 : i64, tpu.core_type = #tpu.core_type<tc>, window_params = [{transform_indices = @transform_0, window_bounds = array<i64: 64, 32>}, {transform_indices = @transform_1, window_bounds = array<i64: 1, 32, 96>}, {transform_indices = @transform_2, window_bounds = array<i64: 1, 1, 96>}, {transform_indices = @transform_3, window_bounds = array<i64: 1, 64, 96>}]} {
    %c0 = arith.constant 0 : index
    %c0_0 = arith.constant 0 : index
    %0 = vector.load %arg3[%c0, %c0_0] : memref<64x32xbf16, #tpu.memory_space<vmem>>, vector<64x32xbf16>
    %c0_1 = arith.constant 0 : index
    %c0_2 = arith.constant 0 : index
    %c0_3 = arith.constant 0 : index
    %1 = vector.load %arg4[%c0_1, %c0_2, %c0_3] : memref<1x32x96xbf16, #tpu.memory_space<vmem>>, vector<1x32x96xbf16>
    %2 = vector.shape_cast %1 : vector<1x32x96xbf16> to vector<32x96xbf16>
    %cst = arith.constant dense<0.000000e+00> : vector<64x96xf32>
    %3 = tpu.matmul %0, %2, %cst {dimension_numbers = #tpu.dot_dimension_numbers<[1], [0], [0], [1], [0, 0, 1, 1], [], []>} : vector<64x32xbf16>, vector<32x96xbf16>, vector<64x96xf32> -> vector<64x96xf32>
    %c0_4 = arith.constant 0 : index
    %c0_5 = arith.constant 0 : index
    %c0_6 = arith.constant 0 : index
    %4 = vector.load %arg5[%c0_4, %c0_5, %c0_6] : memref<1x1x96xf32, #tpu.memory_space<vmem>>, vector<1x1x96xf32>
    %5 = vector.shape_cast %4 : vector<1x1x96xf32> to vector<1x96xf32>
    %6 = vector.broadcast %5 : vector<1x96xf32> to vector<64x96xf32>
    %7 = arith.addf %3, %6 : vector<64x96xf32>
    %c0_7 = arith.constant 0 : index
    %c0_8 = arith.constant 0 : index
    %c0_9 = arith.constant 0 : index
    %8 = vector.load %arg6[%c0_7, %c0_8, %c0_9] : memref<1x64x96xf32, #tpu.memory_space<vmem>>, vector<1x64x96xf32>
    %9 = vector.shape_cast %8 : vector<1x64x96xf32> to vector<64x96xf32>
    %10 = vector.shape_cast %7 : vector<64x96xf32> to vector<1x64x96xf32>
    tpu.vector_store %arg6[%c0_7, %c0_8, %c0_9], %10 {strides = array<i32>} : memref<1x64x96xf32, #tpu.memory_space<vmem>>, vector<1x64x96xf32>,
    return
  }
  func.func @transform_0(%arg0: i32, %arg1: i32, %arg2: i32) -> (i32, i32) {
    %c0_i32 = arith.constant 0 : i32
    %c0_i32_0 = arith.constant 0 : i32
    return %arg2, %c0_i32 : i32, i32
  }
  func.func @transform_1(%arg0: i32, %arg1: i32, %arg2: i32) -> (i32, i32, i32) {
    %c0_i32 = arith.constant 0 : i32
    %c0_i32_0 = arith.constant 0 : i32
    return %arg0, %c0_i32, %arg1 : i32, i32, i32
  }
  func.func @transform_2(%arg0: i32, %arg1: i32, %arg2: i32) -> (i32, i32, i32) {
    %c0_i32 = arith.constant 0 : i32
    %c0_i32_0 = arith.constant 0 : i32
    return %arg0, %c0_i32, %arg1 : i32, i32, i32
  }
  func.func @transform_3(%arg0: i32, %arg1: i32, %arg2: i32) -> (i32, i32, i32) {
    %c0_i32 = arith.constant 0 : i32
    return %arg0, %arg2, %arg1 : i32, i32, i32
  }
}

</mosaic_0001>

<llo_original>
// kernel: tpu_custom_call.1
$region0: #{tpu_custom_call.1}
  #allocation0 [shape = 'u32[]', space=smem, size = 0x4, offset = 0x4, fixed_abs, tag = 'smem constant byte address 0x4 - core index']
  #allocation1 [shape = 'u32[144,128]{1,0:T(1,128)}', space=vmem, size = 0x12000, scoped, tag = 'internal scratch']
  %s0 = inlined_call_operand.vmem [shape: bf16[64,32], index: 0, kind: input, shape index: {}]
  %s1 = inlined_call_operand.vmem [shape: bf16[2,32,96], index: 1, kind: input, shape index: {}]
  %s2 = inlined_call_operand.vmem [shape: f32[2,1,96], index: 2, kind: input, shape index: {}]
  %s3 = inlined_call_operand.hbm [shape: f32[2,64,96], index: 3, kind: output, shape index: {}]
  %s4 = sld [smem:[#allocation0]]
  $region45: #{tpu_custom_call.1} parent=0
    _
  %s6 = ssub.s32 1, %s4
  %s7 = scalar_select 0, %s6, %s4
  $region1: #{tpu_custom_call.1} parent=0
    #allocation2 [shape = 'u8[65536]{0}', space=vmem, size = 0x10000, scoped, tag = 'output window, operand 0']
    #allocation3 [shape = 's32[2]{0}', space=sflag, size = 0x8, scoped, tag = 'scoped memory for tpu_custom_call.1']
    %8 = vsyncpa [#allocation3], 0
    %s9 = scalar_lea.sflag [#allocation3], 1
    %10 = vsyncpa %s9, 0
    loop: start=0, step=1, limit=4
    $region2: #{tpu_custom_call.1} parent=1 // loop_pre_header
      _
    $region3: #{tpu_custom_call.1} parent=1 // loop_header
      %s12 = sphi 0, %s16
      %p13 = scmp.ge.s32.totalorder %s12, 4
      %s19 = sphi 0, %s38
      %s20 = sphi 0, %s34
      %s21 = sphi 0, %s30
      %s22 = sphi 0, %s19
      %s23 = sphi 0, %s20
      %s24 = sphi 0, %s21
      %s25 = sphi 0, %s22
      %s26 = sphi 0, %s23
      %s27 = sphi 0, %s24
      %s41 = sphi 0, %s43
      %s44 = sphi 0, %s41
      %s45 = sphi 0, %s44
      %s61 = sphi 0, %s45
      %s69 = sphi 0, %s71
      %s72 = sphi 0, %s69
      %s73 = sphi 0, %s72
      %s89 = sphi 0, %s73
      %s97 = sphi 0, %s99
      %s100 = sphi 0, %s97
      %s101 = sphi 0, %s100
      %s117 = sphi 0, %s101
      %s127 = sphi 0, %s129
      %s130 = sphi 0, %s127
      %s131 = sphi 0, %s130
      %s147 = sphi 0, %s131
    $region4: #{tpu_custom_call.1} parent=1 // loop_header_branch
      %15 = sbr.rel (%p13) target = $region8
    $region5: #{tpu_custom_call.1} parent=1 // loop_body
      %s17 = ssub.s32 %s12, 1
      %s18 = ssub.s32 %s12, 2
      %s28 = sadd.s32 1, %s21
      %p29 = scmp.ge.s32.totalorder %s28, 1
      %s30 = scalar_select %p29, 0, %s28
      %s31 = sadd.s32 1, %s20
      %s32 = scalar_select %p29, %s31, %s20
      %p33 = scmp.ge.s32.totalorder %s32, 1
      %s34 = scalar_select %p33, 0, %s32
      %s35 = sadd.s32 1, %s19
      %s36 = scalar_select %p33, %s35, %s19
      %p37 = scmp.ge.s32.totalorder %s36, 2
      %s38 = scalar_select %p37, 0, %s36
      %s39 = ssub.s32 %s21, %s30
      %p40 = scmp.eq.s32.totalorder %s39, 0
      %s42 = sadd.s32 %s41, 1
      %s43 = scalar_select %p40, %s41, %s42
      %p46 = pneg %p40
      %p47 = scmp.eq.s32.totalorder %s12, 1
      %p48 = por %p46, %p47
      %p49 = scmp.ne.s32.totalorder %s41, %s44
      %p50 = scmp.eq.s32.totalorder %s12, 0
      %p51 = por %p49, %p50
      %p52 = scmp.ne.s32.totalorder %s41, %s44
      %p53 = scmp.eq.s32.totalorder %s17, 1
      %p54 = por %p52, %p53
      %p55 = scmp.ne.s32.totalorder %s44, %s45
      %p56 = scmp.eq.s32.totalorder %s17, 0
      %p57 = por %p55, %p56
      %p58 = scmp.ne.s32.totalorder %s44, %s45
      %p59 = scmp.eq.s32.totalorder %s18, 1
      %p60 = por %p58, %p59
      %p62 = scmp.ne.s32.totalorder %s45, %s61
      %p63 = scmp.eq.s32.totalorder %s18, 0
      %p64 = por %p62, %p63
      %s65 = ssub.s32 %s19, %s38
      %s66 = ssub.s32 %s20, %s34
      %s67 = sor.u32 %s65, %s66
      %p68 = scmp.eq.s32.totalorder %s67, 0
      %s70 = sadd.s32 %s69, 1
      %s71 = scalar_select %p68, %s69, %s70
      %p74 = pneg %p68
      %p75 = scmp.eq.s32.totalorder %s12, 1
      %p76 = por %p74, %p75
      %p77 = scmp.ne.s32.totalorder %s69, %s72
      %p78 = scmp.eq.s32.totalorder %s12, 0
      %p79 = por %p77, %p78
      %p80 = scmp.ne.s32.totalorder %s69, %s72
      %p81 = scmp.eq.s32.totalorder %s17, 1
      %p82 = por %p80, %p81
      %p83 = scmp.ne.s32.totalorder %s72, %s73
      %p84 = scmp.eq.s32.totalorder %s17, 0
      %p85 = por %p83, %p84
      %p86 = scmp.ne.s32.totalorder %s72, %s73
      %p87 = scmp.eq.s32.totalorder %s18, 1
      %p88 = por %p86, %p87
      %p90 = scmp.ne.s32.totalorder %s73, %s89
      %p91 = scmp.eq.s32.totalorder %s18, 0
      %p92 = por %p90, %p91
      %s93 = ssub.s32 %s19, %s38
      %s94 = ssub.s32 %s20, %s34
      %s95 = sor.u32 %s93, %s94
      %p96 = scmp.eq.s32.totalorder %s95, 0
      %s98 = sadd.s32 %s97, 1
      %s99 = scalar_select %p96, %s97, %s98
      %p102 = pneg %p96
      %p103 = scmp.eq.s32.totalorder %s12, 1
      %p104 = por %p102, %p103
      %p105 = scmp.ne.s32.totalorder %s97, %s100
      %p106 = scmp.eq.s32.totalorder %s12, 0
      %p107 = por %p105, %p106
      %p108 = scmp.ne.s32.totalorder %s97, %s100
      %p109 = scmp.eq.s32.totalorder %s17, 1
      %p110 = por %p108, %p109
      %p111 = scmp.ne.s32.totalorder %s100, %s101
      %p112 = scmp.eq.s32.totalorder %s17, 0
      %p113 = por %p111, %p112
      %p114 = scmp.ne.s32.totalorder %s100, %s101
      %p115 = scmp.eq.s32.totalorder %s18, 1
      %p116 = por %p114, %p115
      %p118 = scmp.ne.s32.totalorder %s101, %s117
      %p119 = scmp.eq.s32.totalorder %s18, 0
      %p120 = por %p118, %p119
      %s121 = ssub.s32 %s19, %s38
      %s122 = ssub.s32 %s21, %s30
      %s123 = sor.u32 %s121, %s122
      %s124 = ssub.s32 %s20, %s34
      %s125 = sor.u32 %s123, %s124
      %p126 = scmp.eq.s32.totalorder %s125, 0
      %s128 = sadd.s32 %s127, 1
      %s129 = scalar_select %p126, %s127, %s128
      %p132 = pneg %p126
      %p133 = scmp.eq.s32.totalorder %s12, 1
      %p134 = por %p132, %p133
      %p135 = scmp.ne.s32.totalorder %s127, %s130
      %p136 = scmp.eq.s32.totalorder %s12, 0
      %p137 = por %p135, %p136
      %p138 = scmp.ne.s32.totalorder %s127, %s130
      %p139 = scmp.eq.s32.totalorder %s17, 1
      %p140 = por %p138, %p139
      %p141 = scmp.ne.s32.totalorder %s130, %s131
      %p142 = scmp.eq.s32.totalorder %s17, 0
      %p143 = por %p141, %p142
      %p144 = scmp.ne.s32.totalorder %s130, %s131
      %p145 = scmp.eq.s32.totalorder %s18, 1
      %p146 = por %p144, %p145
      %p148 = scmp.ne.s32.totalorder %s131, %s147
      %p149 = scmp.eq.s32.totalorder %s18, 0
      %p150 = por %p148, %p149
      %p151 = scmp.le.s32.totalorder 1, %s12
      %p152 = scmp.lt.s32.totalorder %s12, 3
      %p153 = pnand %p151, %p152
      %p154 = pneg %p153
      // Predicated region
      $region9: #{tpu_custom_call.1} parent=5 // pred_check
        _
      $region10: #{tpu_custom_call.1} parent=5 // pred_check_branch
        %156 = sbr.rel (%p153) target = $region12
      $region11: #{tpu_custom_call.1} parent=5 // pred_region
        %s157 = ssub.s32 %s12, 1
        // Predicated region
        $region13: #{tpu_custom_call.1} parent=11 // pred_check
          %p158 = pneg %p57
        $region14: #{tpu_custom_call.1} parent=11 // pred_check_branch
          %160 = sbr.rel (%p158) target = $region16
        $region15: #{tpu_custom_call.1} parent=11 // pred_region
          %s161 = smul.u32 8, %s24
          %p162 = scmp.lt.s32.totalorder %s161, 7
          %s163 = scalar_select %p162, %s161, 7
          %s164 = smul.addr %s163, 4
          %s165 = scalar_lea.vmem %s0, %s164
          %s166 = smul.u32 8, %s24
        $region16: #{tpu_custom_call.1} parent=11 // pred_fallthru
          _
      $region12: #{tpu_custom_call.1} parent=5 // pred_fallthru
        _
      %p167 = scmp.lt.s32.totalorder %s12, 2
      // Predicated region
      $region17: #{tpu_custom_call.1} parent=5 // pred_check
        %p168 = pneg %p167
      $region18: #{tpu_custom_call.1} parent=5 // pred_check_branch
        %170 = sbr.rel (%p168) target = $region20
      $region19: #{tpu_custom_call.1} parent=5 // pred_region
        // Predicated region
        $region21: #{tpu_custom_call.1} parent=19 // pred_check
          %p171 = pneg %p79
        $region22: #{tpu_custom_call.1} parent=19 // pred_check_branch
          %173 = sbr.rel (%p171) target = $region24
        $region23: #{tpu_custom_call.1} parent=19 // pred_region
          %p174 = scmp.lt.s32.totalorder %s19, 1
          %s175 = scalar_select %p174, %s19, 1
          %p176 = scmp.lt.s32.totalorder %s20, 0
          %s177 = scalar_select %p176, %s20, 0
          %s178 = smul.addr %s175, 4
          %s179 = sadd.s32 %s177, %s178
          %s180 = smul.addr %s179, 4
          %s181 = scalar_lea.vmem %s1, %s180
        $region24: #{tpu_custom_call.1} parent=19 // pred_fallthru
          _
        // Predicated region
        $region25: #{tpu_custom_call.1} parent=19 // pred_check
          %p182 = pneg %p107
        $region26: #{tpu_custom_call.1} parent=19 // pred_check_branch
          %184 = sbr.rel (%p182) target = $region28
        $region27: #{tpu_custom_call.1} parent=19 // pred_region
          %p185 = scmp.lt.s32.totalorder %s19, 1
          %s186 = scalar_select %p185, %s19, 1
          %p187 = scmp.lt.s32.totalorder %s20, 0
          %s188 = scalar_select %p187, %s20, 0
          %s189 = sadd.s32 %s188, %s186
          %s190 = scalar_lea.vmem %s2, %s189
        $region28: #{tpu_custom_call.1} parent=19 // pred_fallthru
          _
      $region20: #{tpu_custom_call.1} parent=5 // pred_fallthru
        _
      %p191 = scmp.le.s32.totalorder 1, %s12
      %p192 = scmp.lt.s32.totalorder %s12, 3
      %p193 = pnand %p191, %p192
      %p194 = pneg %p193
      // Predicated region
      $region29: #{tpu_custom_call.1} parent=5 // pred_check
        _
      $region30: #{tpu_custom_call.1} parent=5 // pred_check_branch
        %196 = sbr.rel (%p193) target = $region32
      $region31: #{tpu_custom_call.1} parent=5 // pred_region
        %s197 = ssub.s32 %s12, 1
        %s198 = smul.u32 8, %s24
        %p199 = scmp.lt.s32.totalorder %s198, 7
        %s200 = scalar_select %p199, %s198, 7
        %s201 = smul.addr %s200, 4
        %s202 = scalar_lea.vmem %s0, %s201
        %p203 = pneg %p57
        %p204 = pneg %p54
        %p205 = scmp.lt.s32.totalorder %s22, 1
        %s206 = scalar_select %p205, %s22, 1
        %p207 = scmp.lt.s32.totalorder %s23, 0
        %s208 = scalar_select %p207, %s23, 0
        %s209 = smul.addr %s206, 4
        %s210 = sadd.s32 %s208, %s209
        %s211 = smul.addr %s210, 4
        %s212 = scalar_lea.vmem %s1, %s211
        %p213 = pneg %p85
        %p214 = pneg %p82
        %p215 = scmp.lt.s32.totalorder %s22, 1
        %s216 = scalar_select %p215, %s22, 1
        %p217 = scmp.lt.s32.totalorder %s23, 0
        %s218 = scalar_select %p217, %s23, 0
        %s219 = sadd.s32 %s218, %s216
        %s220 = scalar_lea.vmem %s2, %s219
        %p221 = pneg %p113
        %p222 = pneg %p110
        %p223 = pneg %p143
        %p224 = pneg %p140
        %s225 = sand.u32 %s130, 1
        %s226 = scalar_lea.sflag [#allocation3], %s225
        %s227 = sand.u32 %s130, 1
        %s228 = smul.addr %s227, 64
        %s229 = scalar_lea.vmem [#allocation2], %s228
        %s230 = smul.u32 8, %s24
        %p231 = scmp.lt.s32.totalorder %s230, 7
        %s232 = scalar_select %p231, %s230, 7
        %s233 = smul.addr %s232, 4
        %s234 = scalar_lea.vmem %s0, %s233
        %s235 = smul.u32 8, %s24
        %p236 = scmp.lt.s32.totalorder %s22, 1
        %s237 = scalar_select %p236, %s22, 1
        %p238 = scmp.lt.s32.totalorder %s23, 0
        %s239 = scalar_select %p238, %s23, 0
        %s240 = smul.addr %s237, 4
        %s241 = sadd.s32 %s239, %s240
        %s242 = smul.addr %s241, 4
        %s243 = scalar_lea.vmem %s1, %s242
        %p244 = scmp.lt.s32.totalorder %s22, 1
        %s245 = scalar_select %p244, %s22, 1
        %p246 = scmp.lt.s32.totalorder %s23, 0
        %s247 = scalar_select %p246, %s23, 0
        %s248 = sadd.s32 %s247, %s245
        %s249 = scalar_lea.vmem %s2, %s248
        %s250 = smul.u32 8, %s24
        %v252 = vld [vmem:[%s234] sm:$0xf]
        %v253 = vld [vmem:[%s234 + $0x4] sm:$0xf]
        %v254 = vld [vmem:[%s234 + $0x8] sm:$0xf]
        %v255 = vld [vmem:[%s234 + $0xc] sm:$0xf]
        %v256 = vld [vmem:[%s234 + $0x10] sm:$0xf]
        %v257 = vld [vmem:[%s234 + $0x14] sm:$0xf]
        %v258 = vld [vmem:[%s234 + $0x18] sm:$0xf]
        %v259 = vld [vmem:[%s234 + $0x1c] sm:$0xf]
        %v260 = vld [vmem:[%s243] sm:$0xf]
        %v261 = vld [vmem:[%s243 + $0x4] sm:$0xf]
        %v262 = vld [vmem:[%s243 + $0x8] sm:$0xf]
        %v263 = vld [vmem:[%s243 + $0xc] sm:$0xf]
        %v264 = vld [vmem:[%s249] sm:$0x1]
        %v266 = vlaneseq
        %v267 = vshrl.u32 %v266, 7
        %v268 = vsub.s32 0, %v267
        %v269 = vrot.slane %v264, %v268
        %v279 = vunpack.c.l.b16 %v252
        %v280 = vunpack.c.l.b16 %v253
        %v281 = vunpack.c.l.b16 %v254
        %v282 = vunpack.c.l.b16 %v255
        %v283 = vunpack.c.l.b16 %v256
        %v284 = vunpack.c.l.b16 %v257
        %v285 = vunpack.c.l.b16 %v258
        %v286 = vunpack.c.l.b16 %v259
        %v287 = vpack.c.b16 %v280, %v279
        %v288 = vpack.c.b16 %v282, %v281
        %v289 = vpack.c.b16 %v284, %v283
        %v290 = vpack.c.b16 %v286, %v285
        %v295 = vunpack.c.l.b16 %v260
        %v296 = vunpack.c.l.b16 %v261
        %v297 = vunpack.c.l.b16 %v262
        %v298 = vunpack.c.l.b16 %v263
        %v299 = vpack.c.b16 %v296, %v295
        %v300 = vpack.c.b16 %v298, %v297
        %vm303 = vcmask 261120
        %v305 = vsel %vm303, %v287, 0
        %v308 = vsel %vm303, %v288, 0
        %v311 = vsel %vm303, %v289, 0
        %v314 = vsel %vm303, %v290, 0
        %316 = vmatprep.subr.bf16.mxu0 0
        %317 = vmatpush1.bf16.msra.mxu0 %v299
        %318 = vmatprep.subr.bf16.mxu0 0
        %319 = vmatpush1.bf16.msra.mxu0 %v300
        %320 = vmatprep.subr.bf16.mxu0 0
        %321 = vmatpush1.bf16.msra.mxu0 0
        %322 = vmatprep.subr.bf16.mxu0 0
        %323 = vmatpush1.bf16.msra.mxu0 0
        %324 = vmatprep.subr.bf16.mxu0 0
        %325 = vmatpush1.bf16.msra.mxu0 0
        %326 = vmatprep.subr.bf16.mxu0 0
        %327 = vmatpush1.bf16.msra.mxu0 0
        %328 = vmatprep.subr.bf16.mxu0 0
        %329 = vmatpush1.bf16.msra.mxu0 0
        %330 = vmatprep.subr.bf16.mxu0 0
        %331 = vmatpush1.bf16.msra.mxu0 0
        %332 = vmatprep.subr.bf16.mxu0 0
        %333 = vmatpush1.bf16.msra.mxu0 0
        %334 = vmatprep.subr.bf16.mxu0 0
        %335 = vmatpush1.bf16.msra.mxu0 0
        %336 = vmatprep.subr.bf16.mxu0 0
        %337 = vmatpush1.bf16.msra.mxu0 0
        %338 = vmatprep.subr.bf16.mxu0 0
        %339 = vmatpush1.bf16.msra.mxu0 0
        %340 = vmatprep.subr.bf16.mxu0 0
        %341 = vmatpush1.bf16.msra.mxu0 0
        %342 = vmatprep.subr.bf16.mxu0 0
        %343 = vmatpush1.bf16.msra.mxu0 0
        %344 = vmatprep.subr.bf16.mxu0 0
        %345 = vmatpush1.bf16.msra.mxu0 0
        %346 = vmatprep.subr.bf16.mxu0 0
        %347 = vmatpush1.bf16.msra.mxu0 0
        %348 = vmatprep.mubr.bf16.mxu0 0
        %349 = vmatmul.mubr.bf16.gmra.mrb[0].mxu0 %v305
        %v350 = vpop.f32.mrb[0].mxu0
        %v351 = vadd.f32 %v269, %v350
        %v352 = vpop.f32.mrb[0].mxu0
        %v353 = vpop.f32.mrb[0].mxu0
        %v354 = vadd.f32 %v269, %v353
        %v355 = vpop.f32.mrb[0].mxu0
        %356 = vmatprep.mubr.bf16.mxu0 0
        %357 = vmatmul.mubr.bf16.gmra.mrb[0].mxu0 %v308
        %v358 = vpop.f32.mrb[0].mxu0
        %v359 = vadd.f32 %v269, %v358
        %v360 = vpop.f32.mrb[0].mxu0
        %v361 = vpop.f32.mrb[0].mxu0
        %v362 = vadd.f32 %v269, %v361
        %v363 = vpop.f32.mrb[0].mxu0
        %364 = vmatprep.mubr.bf16.mxu0 0
        %365 = vmatmul.mubr.bf16.gmra.mrb[0].mxu0 %v311
        %v366 = vpop.f32.mrb[0].mxu0
        %v367 = vadd.f32 %v269, %v366
        %v368 = vpop.f32.mrb[0].mxu0
        %v369 = vpop.f32.mrb[0].mxu0
        %v370 = vadd.f32 %v269, %v369
        %v371 = vpop.f32.mrb[0].mxu0
        %372 = vmatprep.mubr.bf16.mxu0 0
        %373 = vmatmul.mubr.bf16.gmra.mrb[0].mxu0 %v314
        %v374 = vpop.f32.mrb[0].mxu0
        %v375 = vadd.f32 %v269, %v374
        %v376 = vpop.f32.mrb[0].mxu0
        %v377 = vpop.f32.mrb[0].mxu0
        %v378 = vadd.f32 %v269, %v377
        %v379 = vpop.f32.mrb[0].mxu0
        %380 = vdwg.mxu0
        %vm381 = vcmask 785408
        %382 = vst.msk [vmem:[%s229] sm:$0xff] %vm381, %v351
        %383 = vst.msk [vmem:[%s229 + $0x8] sm:$0xff] %vm381, %v354
        %384 = vst.msk [vmem:[%s229 + $0x10] sm:$0xff] %vm381, %v359
        %385 = vst.msk [vmem:[%s229 + $0x18] sm:$0xff] %vm381, %v362
        %386 = vst.msk [vmem:[%s229 + $0x20] sm:$0xff] %vm381, %v367
        %387 = vst.msk [vmem:[%s229 + $0x28] sm:$0xff] %vm381, %v370
        %388 = vst.msk [vmem:[%s229 + $0x30] sm:$0xff] %vm381, %v375
        %389 = vst.msk [vmem:[%s229 + $0x38] sm:$0xff] %vm381, %v378
        %s390 = sand.u32 %s130, 1
        %s391 = scalar_lea.sflag [#allocation3], %s390
        %s392 = sand.u32 %s130, 1
        %s393 = smul.addr %s392, 64
        %s394 = scalar_lea.vmem [#allocation2], %s393
        // Predicated region
        $region33: #{tpu_custom_call.1} parent=31 // pred_check
          %p395 = pneg %p140
        $region34: #{tpu_custom_call.1} parent=31 // pred_check_branch
          %397 = sbr.rel (%p395) target = $region36
        $region35: #{tpu_custom_call.1} parent=31 // pred_region
          %s398 = smul.u32 8, %s24
          %s400 = ssub.s32 1024, 1024
          %401 = vsyncadd %s391, %s400
          %s402 = sadd.s32 %s23, %s398
          %s403 = smul.addr %s22, 8
          %s404 = sadd.s32 %s402, %s403
          %s405 = smul.addr %s404, 128
          %s406 = scalar_lea.hbm %s3, %s405
          %s407 = sshll.u32 %s394, 4
          %s408 = int_to_ptr.vmem [resolvable:$true] %s407
          %413 = dma.vmem_to_hbm [thread:$0]  %s408, 1024, %s406, %s391, 128, 128, 8
        $region36: #{tpu_custom_call.1} parent=31 // pred_fallthru
          _
      $region32: #{tpu_custom_call.1} parent=5 // pred_fallthru
        _
      %p414 = scmp.le.s32.totalorder 2, %s12
      // Predicated region
      $region37: #{tpu_custom_call.1} parent=5 // pred_check
        %p415 = pneg %p414
      $region38: #{tpu_custom_call.1} parent=5 // pred_check_branch
        %417 = sbr.rel (%p415) target = $region40
      $region39: #{tpu_custom_call.1} parent=5 // pred_region
        %s418 = ssub.s32 %s12, 2
        // Predicated region
        $region41: #{tpu_custom_call.1} parent=39 // pred_check
          %p419 = pneg %p146
        $region42: #{tpu_custom_call.1} parent=39 // pred_check_branch
          %421 = sbr.rel (%p419) target = $region44
        $region43: #{tpu_custom_call.1} parent=39 // pred_region
          %s422 = sand.u32 %s131, 1
          %s423 = scalar_lea.sflag [#allocation3], %s422
          %s424 = sand.u32 %s131, 1
          %s425 = smul.addr %s424, 64
          %s426 = scalar_lea.vmem [#allocation2], %s425
          %427 = dma.done %s423, 1024
        $region44: #{tpu_custom_call.1} parent=39 // pred_fallthru
          _
      $region40: #{tpu_custom_call.1} parent=5 // pred_fallthru
        _
    $region6: #{tpu_custom_call.1} parent=1 // loop_footer
      %s16 = sadd.s32 1, %s12
    $region7: #{tpu_custom_call.1} parent=1 // loop_footer_branch
      %11 = sbr.rel target = $region3
    $region8: #{tpu_custom_call.1} parent=1 // loop_exit
      _
    %428 = vsyncpa [#allocation3], 1
    %s429 = scalar_lea.sflag [#allocation3], 1
    %430 = vsyncpa %s429, 1

</llo_original>
